<compile_context>
chip_gen: v6e
topology: v6e:2x2x1
jax: 0.10.0
libtpu: 0.0.40
codegen_flags: <defaults>
</compile_context>

<pallas_src>
import functools

import jax
import jax.numpy as jnp
import numpy as np
from jax.experimental import pallas as pl
from jax.experimental.pallas import tpu as pltpu

# ---------------- problem constants (fixed by the module definition) ---------
H = W = 28            # fc expects 14*14*32 -> input spatial must be 28x28
K = 5                 # conv kernel size
PAD = 2
C_IN = 1
C_OUT = 32
HP = H // 2           # pooled spatial = 14
NPOOL = HP * HP       # 196 pooled positions per image
NPOOL_PAD = 200       # padded to a multiple of 8 rows per image (tile-aligned flatten)
FC_IN = NPOOL * C_OUT          # 6272 (logical)
FC_IN_PAD = NPOOL_PAD * C_OUT  # 6400 (padded FC contraction dim)
FC_OUT = 10
LANES = 128           # 4 pool-window copies * 32 channels -> full lane width
KK = K * K * C_IN     # 25
PACK_K = 4 * KK       # 100
BN_EPS = 1e-5


# ---------------- wrapper-side layout plumbing (pure JAX glue) ----------------
def im2col_packed(x_nhwc):
    """[N,28,28,1] -> [N*200, 100]: for each pooled output position, the four 5x5
    conv patches of its 2x2 pool window (group-major), plus 4 zero pad rows/image."""
    n = x_nhwc.shape[0]
    xp = jnp.pad(x_nhwc, ((0, 0), (PAD, PAD), (PAD, PAD), (0, 0)))
    cols = []
    for di in range(K):
        for dj in range(K):
            cols.append(xp[:, di:di + H, dj:dj + W, :])
    patches = jnp.stack(cols, axis=-2).reshape(n, H, W, KK)     # [N,28,28,25]
    patches = patches.reshape(n, HP, 2, HP, 2, KK)
    patches = jnp.transpose(patches, (0, 1, 3, 2, 4, 5))        # [N,14,14,2,2,25]
    patches = patches.reshape(n, NPOOL, PACK_K)
    patches = jnp.pad(patches, ((0, 0), (0, NPOOL_PAD - NPOOL), (0, 0)))
    return patches.reshape(n * NPOOL_PAD, PACK_K)
    # TODO(synk): move im2col into the kernel (DMA raw padded image, build patch rows
    # in VMEM) to remove the ~25x wrapper-side input inflation entirely.


def block_diag_conv_w(conv_w):
    """[25,32] -> block-diagonal [100,128]: one copy per 2x2 pool-window position."""
    wbd = jnp.zeros((PACK_K, LANES), jnp.float32)
    for g in range(4):
        wbd = wbd.at[g * KK:(g + 1) * KK, g * C_OUT:(g + 1) * C_OUT].set(conv_w)
    return wbd


def permute_pad_fc(fc_w, fc_b):
    """fc_w rows from PyTorch CHW order -> HWC order, zero rows for the 4 padded
    pooled positions per image, out dim padded to 128 lanes."""
    w = fc_w.reshape(C_OUT, HP, HP, FC_OUT)
    w = jnp.transpose(w, (1, 2, 0, 3)).reshape(NPOOL, C_OUT, FC_OUT)   # [196,32,10]
    w = jnp.pad(w, ((0, NPOOL_PAD - NPOOL), (0, 0), (0, LANES - FC_OUT)))
    w = w.reshape(FC_IN_PAD, LANES)                                    # [6400,128]
    b = jnp.pad(fc_b, ((0, 0), (0, LANES - FC_OUT)))                   # [1,128]
    return w, b


def _pick_imgs_per_tile(n, requested):
    # rows per image is 200 (8-aligned), so any divisor of n works.
    req = max(1, min(requested, n))
    for cand in range(req, 0, -1):
        if n % cand == 0:
            return cand
    return n


# ---------------- Pallas kernels ----------------------------------------------
def conv_stats_kernel(patches_ref, wbd_ref, bias_ref, stats_ref):
    """Pass 1: conv as packed im2col matmul, emit per-tile BN partial sums only."""
    conv = jnp.dot(patches_ref[...], wbd_ref[...],
                   preferred_element_type=jnp.float32)
    conv = conv + bias_ref[...]                                  # bias [1,128]
    # Pad rows contribute exactly `bias` per lane (zero patches); corrected in glue.
    s = jnp.sum(conv, axis=0, keepdims=True)                     # [1,128]
    sq = jnp.sum(conv * conv, axis=0, keepdims=True)             # [1,128]
    stats_ref[...] = jnp.concatenate([s, sq], axis=0).reshape(1, 2, LANES)


def fused_fwd_kernel(patches_ref, wbds_ref, small_ref, fcw_ref, out_ref,
                     *, imgs_per_tile):
    """Pass 2: conv recompute (BN folded into weights) + ReLU + MaxPool + FC."""
    # Conv with BN folded: wbds = wbd * (gamma*invstd); small[0] = conv_b*scale + shift.
    conv = jnp.dot(patches_ref[...], wbds_ref[...],
                   preferred_element_type=jnp.float32)
    act = jnp.maximum(conv + small_ref[0:1, :], 0.0)             # BN + ReLU (f32 VPU)
    # MaxPool2d(2,2): lane-group max over the 4 packed pool-window copies (XLU rolls).
    t = jnp.maximum(act, pltpu.roll(act, shift=64, axis=1))
    p = jnp.maximum(t, pltpu.roll(t, shift=32, axis=1))
    pooled = p[:, :C_OUT]                                        # [rows, 32]
    # Flatten in (H,W,C) order; rows/image = 200 so this relayout is tile-aligned.
    feat = pooled.reshape(imgs_per_tile, FC_IN_PAD)
    out = jnp.dot(feat.astype(fcw_ref.dtype), fcw_ref[...],
                  preferred_element_type=jnp.float32) + small_ref[1:2, :]
    out_ref[...] = out.reshape(1, imgs_per_tile, LANES)


# ---------------- forward wrapper ----------------------------------------------
def cnn_forward(x_nchw, params, imgs_per_tile=32, mxu_dtype=jnp.float32):
    """x_nchw: [N,1,28,28] float32 -> logits [N,10] float32.

    mxu_dtype=jnp.bfloat16 halves HBM traffic of patches / weights on v6e/v7x
    (f32 accumulation and f32 VPU math are kept); default f32 for strict accuracy.
    """
    n = x_nchw.shape[0]
    ipt = _pick_imgs_per_tile(n, imgs_per_tile)
    ntiles = n // ipt
    rows_per_tile = ipt * NPOOL_PAD
    total_rows = n * NPOOL_PAD
    dt_bytes = jnp.dtype(mxu_dtype).itemsize

    # layout plumbing (one-time, wrapper side)
    x_nhwc = jnp.transpose(x_nchw, (0, 2, 3, 1))
    patches = im2col_packed(x_nhwc).astype(mxu_dtype)            # [N*200, 100]
    wbd = block_diag_conv_w(params["conv_w"])                    # [100, 128] f32
    bias128 = jnp.tile(params["conv_b"], (1, 4))                 # [1, 128]   f32
    fcw_pad, fcb_pad = permute_pad_fc(params["fc_w"], params["fc_b"])
    fcw_pad = fcw_pad.astype(mxu_dtype)                          # [6400, 128]

    cparams = pltpu.CompilerParams(
        dimension_semantics=("parallel",),
        vmem_limit_bytes=48 * 1024 * 1024)   # fits v7x's 64 MiB; ample on v5e/v6e

    const1 = dict(pipeline_mode=pl.Buffered(1))   # grid-invariant operands: 1 buffer

    # ---- pass 1: conv (packed) + per-tile BN partial sums (stats only) ----------
    ce1 = pl.CostEstimate(
        flops=2 * total_rows * PACK_K * LANES,
        transcendentals=0,
        bytes_accessed=(total_rows * PACK_K * dt_bytes
                        + PACK_K * LANES * dt_bytes
                        + LANES * 4 + ntiles * 2 * LANES * 4))
    stats = pl.pallas_call(
        conv_stats_kernel,
        out_shape=jax.ShapeDtypeStruct((ntiles, 2, LANES), jnp.float32),
        grid=(ntiles,),
        in_specs=[
            pl.BlockSpec((rows_per_tile, PACK_K), lambda i: (i, 0)),
            pl.BlockSpec((PACK_K, LANES), lambda i: (0, 0), **const1),
            pl.BlockSpec((1, LANES), lambda i: (0, 0), **const1),
        ],
        out_specs=pl.BlockSpec((1, 2, LANES), lambda i: (i, 0, 0)),
        compiler_params=cparams,
        cost_estimate=ce1,
    )(patches, wbd.astype(mxu_dtype), bias128)

    # ---- full-batch BN statistics: tiny per-channel reduction (glue) ------------
    tot = jnp.sum(stats, axis=0)                                 # [2, 128] per lane
    # Remove the exactly-known contribution of the 4 zero pad rows per image
    # (each pad row's conv value is exactly `bias` per lane).
    pad_rows = jnp.float32(n * (NPOOL_PAD - NPOOL))
    s_lane = tot[0] - pad_rows * bias128[0]
    sq_lane = tot[1] - pad_rows * bias128[0] ** 2
    s_c = s_lane.reshape(4, C_OUT).sum(axis=0)                   # fold pool-window copies
    sq_c = sq_lane.reshape(4, C_OUT).sum(axis=0)
    count = jnp.float32(n * H * W)
    mean = s_c / count
    var = sq_c / count - mean * mean                             # biased (training-mode)
    invstd = jax.lax.rsqrt(var + BN_EPS)
    scale = params["bn_gamma"][0] * invstd                       # [32]
    shift = params["bn_beta"][0] - mean * scale                  # [32]
    scale128 = jnp.tile(scale, 4)[None, :]                       # [1,128]
    add128 = bias128 * scale128 + jnp.tile(shift, 4)[None, :]    # conv_b*scale + shift
    wbd_scaled = (wbd * scale128).astype(mxu_dtype)              # BN folded into weight
    small = jnp.concatenate([add128, fcb_pad], axis=0)           # [2,128]

    # ---- pass 2: conv recompute + ReLU + MaxPool + FC, tiled over the batch ------
    ce2 = pl.CostEstimate(
        flops=(2 * total_rows * PACK_K * LANES
               + 2 * n * FC_IN_PAD * LANES
               + 6 * total_rows * LANES),
        transcendentals=0,
        bytes_accessed=(total_rows * PACK_K * dt_bytes
                        + PACK_K * LANES * dt_bytes
                        + 2 * LANES * 4
                        + FC_IN_PAD * LANES * dt_bytes
                        + n * LANES * 4))
    kernel2 = functools.partial(fused_fwd_kernel, imgs_per_tile=ipt)
    out3 = pl.pallas_call(
        kernel2,
        out_shape=jax.ShapeDtypeStruct((ntiles, ipt, LANES), jnp.float32),
        grid=(ntiles,),
        in_specs=[
            pl.BlockSpec((rows_per_tile, PACK_K), lambda i: (i, 0)),
            pl.BlockSpec((PACK_K, LANES), lambda i: (0, 0), **const1),
            pl.BlockSpec((2, LANES), lambda i: (0, 0), **const1),
            pl.BlockSpec((FC_IN_PAD, LANES), lambda i: (0, 0), **const1),
        ],
        out_specs=pl.BlockSpec((1, ipt, LANES), lambda i: (i, 0, 0)),
        compiler_params=cparams,
        cost_estimate=ce2,
    )(patches, wbd_scaled, small, fcw_pad)

    return out3.reshape(n, LANES)[:, :FC_OUT]


# ---------------- pure-JAX reference (PyTorch-faithful math) -------------------
def cnn_reference(x_nchw, params):
    n = x_nchw.shape[0]
    x_nhwc = jnp.transpose(x_nchw, (0, 2, 3, 1))
    xp = jnp.pad(x_nhwc, ((0, 0), (PAD, PAD), (PAD, PAD), (0, 0)))
    cols = []
    for di in range(K):
        for dj in range(K):
            cols.append(xp[:, di:di + H, dj:dj + W, :])
    patches = jnp.stack(cols, axis=-2).reshape(n * H * W, KK)
    conv = patches @ params["conv_w"] + params["conv_b"]
    mean = jnp.mean(conv, axis=0, keepdims=True)
    var = jnp.mean((conv - mean) ** 2, axis=0, keepdims=True)
    bn = (conv - mean) * jax.lax.rsqrt(var + BN_EPS) * params["bn_gamma"] + params["bn_beta"]
    act = jnp.maximum(bn, 0.0).reshape(n, HP, 2, HP, 2, C_OUT)
    pooled = jnp.max(act, axis=(2, 4))                           # [N,14,14,32]
    feat = jnp.transpose(pooled, (0, 3, 1, 2)).reshape(n, FC_IN) # CHW flatten
    return feat @ params["fc_w"] + params["fc_b"]


# ---------------- deterministic parameter init ----------------------------------
def init_params(key):
    ks = jax.random.split(key, 6)
    conv_w = (jax.random.normal(ks[0], (KK, C_OUT), jnp.float32)
              * (1.0 / np.sqrt(KK)))
    conv_b = jax.random.normal(ks[1], (1, C_OUT), jnp.float32) * 0.1
    bn_gamma = 1.0 + 0.1 * jax.random.normal(ks[2], (1, C_OUT), jnp.float32)
    bn_beta = 0.1 * jax.random.normal(ks[3], (1, C_OUT), jnp.float32)
    # fc weight stored [FC_IN, FC_OUT] with PyTorch's C*H*W row order.
    fc_w = (jax.random.normal(ks[4], (FC_IN, FC_OUT), jnp.float32)
            * (1.0 / np.sqrt(FC_IN)))
    fc_b = jax.random.normal(ks[5], (1, FC_OUT), jnp.float32) * 0.1
    return dict(conv_w=conv_w, conv_b=conv_b, bn_gamma=bn_gamma,
                bn_beta=bn_beta, fc_w=fc_w, fc_b=fc_b)


if __name__ == "__main__":
    key = jax.random.PRNGKey(0)
    k_x, k_p = jax.random.split(key)

    N = 4  # small batch; spatial/channel sizes fixed by the fc layer (1x28x28)
    x = jax.random.normal(k_x, (N, C_IN, H, W), jnp.float32)
    params = init_params(k_p)

    # imgs_per_tile=2 -> 2 grid tiles: exercises the batch-tiled, cross-tile BN path.
    out = cnn_forward(x, params, imgs_per_tile=2)
    out = jax.block_until_ready(out)

    ref = jax.block_until_ready(cnn_reference(x, params))
    np.testing.assert_allclose(np.asarray(out), np.asarray(ref),
                               rtol=1e-3, atol=1e-3)
    assert out.shape == (N, FC_OUT) and out.dtype == jnp.float32

    # TODO(synk): on v6e/v7x call cnn_forward(..., imgs_per_tile=64, mxu_dtype=jnp.bfloat16)
    # after per-generation accuracy validation; default stays f32 for the 1e-3 check.
    print("KERNEL_OK")
</pallas_src>

<mosaic_0001>
module attributes {stable_mosaic.version = 11 : i64} {
  func.func @conv_stats_kernel(%arg0: i32, %arg1: memref<400x100xf32, #tpu.memory_space<vmem>>, %arg2: memref<100x128xf32, #tpu.memory_space<vmem>>, %arg3: memref<1x128xf32, #tpu.memory_space<vmem>>, %arg4: memref<1x2x128xf32, #tpu.memory_space<vmem>>) attributes {dimension_semantics = [#tpu.dimension_semantics<parallel>], iteration_bounds = array<i64: 2>, scalar_prefetch = 0 : i64, scratch_operands = 0 : i64, tpu.core_type = #tpu.core_type<tc>, window_params = [{transform_indices = @transform_0, window_bounds = array<i64: 400, 100>}, {pipeline_mode = #tpu.pipeline_mode<synchronous>, transform_indices = @transform_1, window_bounds = array<i64: 100, 128>}, {pipeline_mode = #tpu.pipeline_mode<synchronous>, transform_indices = @transform_2, window_bounds = array<i64: 1, 128>}, {transform_indices = @transform_3, window_bounds = array<i64: 1, 2, 128>}]} {
    %c0 = arith.constant 0 : index
    %c0_0 = arith.constant 0 : index
    %0 = vector.load %arg1[%c0, %c0_0] : memref<400x100xf32, #tpu.memory_space<vmem>>, vector<400x100xf32>
    %c0_1 = arith.constant 0 : index
    %c0_2 = arith.constant 0 : index
    %1 = vector.load %arg2[%c0_1, %c0_2] : memref<100x128xf32, #tpu.memory_space<vmem>>, vector<100x128xf32>
    %cst = arith.constant dense<0.000000e+00> : vector<400x128xf32>
    %2 = tpu.matmul %0, %1, %cst {dimension_numbers = #tpu.dot_dimension_numbers<[1], [0], [0], [1], [0, 0, 1, 1], [], []>} : vector<400x100xf32>, vector<100x128xf32>, vector<400x128xf32> -> vector<400x128xf32>
    %c0_3 = arith.constant 0 : index
    %c0_4 = arith.constant 0 : index
    %3 = vector.load %arg3[%c0_3, %c0_4] : memref<1x128xf32, #tpu.memory_space<vmem>>, vector<1x128xf32>
    %4 = vector.broadcast %3 : vector<1x128xf32> to vector<400x128xf32>
    %5 = arith.addf %2, %4 : vector<400x128xf32>
    %cst_5 = arith.constant dense<0.000000e+00> : vector<128xf32>
    %6 = vector.multi_reduction <add>, %5, %cst_5 [0] : vector<400x128xf32> to vector<128xf32>
    %7 = vector.shape_cast %6 : vector<128xf32> to vector<1x128xf32>
    %8 = arith.mulf %5, %5 : vector<400x128xf32>
    %cst_6 = arith.constant dense<0.000000e+00> : vector<128xf32>
    %9 = vector.multi_reduction <add>, %8, %cst_6 [0] : vector<400x128xf32> to vector<128xf32>
    %10 = vector.shape_cast %9 : vector<128xf32> to vector<1x128xf32>
    %11 = tpu.concatenate %7, %10 in 0 : vector<1x128xf32>, vector<1x128xf32> -> vector<2x128xf32>
    %12 = vector.shape_cast %11 : vector<2x128xf32> to vector<1x2x128xf32>
    %c0_7 = arith.constant 0 : index
    %c0_8 = arith.constant 0 : index
    %c0_9 = arith.constant 0 : index
    %13 = vector.load %arg4[%c0_7, %c0_8, %c0_9] : memref<1x2x128xf32, #tpu.memory_space<vmem>>, vector<1x2x128xf32>
    tpu.vector_store %arg4[%c0_7, %c0_8, %c0_9], %12 {strides = array<i32>} : memref<1x2x128xf32, #tpu.memory_space<vmem>>, vector<1x2x128xf32>,
    return
  }
  func.func @transform_0(%arg0: i32) -> (i32, i32) {
    %c0_i32 = arith.constant 0 : i32
    %c0_i32_0 = arith.constant 0 : i32
    return %arg0, %c0_i32 : i32, i32
  }
  func.func @transform_1(%arg0: i32) -> (i32, i32) {
    %c0_i32 = arith.constant 0 : i32
    %c0_i32_0 = arith.constant 0 : i32
    %c0_i32_1 = arith.constant 0 : i32
    return %c0_i32, %c0_i32_0 : i32, i32
  }
  func.func @transform_2(%arg0: i32) -> (i32, i32) {
    %c0_i32 = arith.constant 0 : i32
    %c0_i32_0 = arith.constant 0 : i32
    %c0_i32_1 = arith.constant 0 : i32
    return %c0_i32, %c0_i32_0 : i32, i32
  }
  func.func @transform_3(%arg0: i32) -> (i32, i32, i32) {
    %c0_i32 = arith.constant 0 : i32
    %c0_i32_0 = arith.constant 0 : i32
    %c0_i32_1 = arith.constant 0 : i32
    return %arg0, %c0_i32, %c0_i32_0 : i32, i32, i32
  }
}

</mosaic_0001>

<llo_original>
// kernel: tpu_custom_call.1
$region0: #{tpu_custom_call.1}
  #allocation0 [shape = 'u32[]', space=smem, size = 0x4, offset = 0x4, fixed_abs, tag = 'smem constant byte address 0x4 - core index']
  #allocation1 [shape = 'u32[144,128]{1,0:T(1,128)}', space=vmem, size = 0x12000, scoped, tag = 'internal scratch']
  %s0 = inlined_call_operand.vmem [shape: f32[800,100], index: 0, kind: input, shape index: {}]
  %s1 = inlined_call_operand.vmem [shape: f32[100,128], index: 1, kind: input, shape index: {}]
  %s2 = inlined_call_operand.vmem [shape: f32[1,128], index: 2, kind: input, shape index: {}]
  %s3 = inlined_call_operand.hbm [shape: f32[2,2,128], index: 3, kind: output, shape index: {}]
  %s4 = sld [smem:[#allocation0]]
  $region45: #{tpu_custom_call.1} parent=0
    _
  %s6 = ssub.s32 1, %s4
  %s7 = scalar_select 0, %s6, %s4
  $region1: #{tpu_custom_call.1} parent=0
    #allocation2 [shape = 'u8[2048]{0}', space=vmem, size = 0x800, scoped, tag = 'output window, operand 0']
    #allocation3 [shape = 's32[2]{0}', space=sflag, size = 0x8, scoped, tag = 'scoped memory for tpu_custom_call.1']
    %8 = vsyncpa [#allocation3], 0
    %s9 = scalar_lea.sflag [#allocation3], 1
    %10 = vsyncpa %s9, 0
    loop: start=0, step=1, limit=4
    $region2: #{tpu_custom_call.1} parent=1 // loop_pre_header
      _
    $region3: #{tpu_custom_call.1} parent=1 // loop_header
      %s12 = sphi 0, %s16
      %p13 = scmp.ge.s32.totalorder %s12, 4
      %s22 = sphi 0, %s24
      %s25 = sphi 0, %s22
      %s26 = sphi 0, %s25
      %s42 = sphi 0, %s26
      %s46 = sphi 0, %s46
      %s48 = sphi 0, %s46
      %s49 = sphi 0, %s48
      %s63 = sphi 0, %s49
      %s67 = sphi 0, %s67
      %s69 = sphi 0, %s67
      %s70 = sphi 0, %s69
      %s84 = sphi 0, %s70
      %s90 = sphi 0, %s92
      %s93 = sphi 0, %s90
      %s94 = sphi 0, %s93
      %s110 = sphi 0, %s94
    $region4: #{tpu_custom_call.1} parent=1 // loop_header_branch
      %15 = sbr.rel (%p13) target = $region8
    $region5: #{tpu_custom_call.1} parent=1 // loop_body
      %s17 = ssub.s32 %s12, 1
      %s18 = ssub.s32 %s12, 2
      %s19 = sadd.s32 %s12, 1
      %s20 = ssub.s32 %s12, %s19
      %p21 = scmp.eq.s32.totalorder %s20, 0
      %s23 = sadd.s32 %s22, 1
      %s24 = scalar_select %p21, %s22, %s23
      %p27 = pneg %p21
      %p28 = scmp.eq.s32.totalorder %s12, 1
      %p29 = por %p27, %p28
      %p30 = scmp.ne.s32.totalorder %s22, %s25
      %p31 = scmp.eq.s32.totalorder %s12, 0
      %p32 = por %p30, %p31
      %p33 = scmp.ne.s32.totalorder %s22, %s25
      %p34 = scmp.eq.s32.totalorder %s17, 1
      %p35 = por %p33, %p34
      %p36 = scmp.ne.s32.totalorder %s25, %s26
      %p37 = scmp.eq.s32.totalorder %s17, 0
      %p38 = por %p36, %p37
      %p39 = scmp.ne.s32.totalorder %s25, %s26
      %p40 = scmp.eq.s32.totalorder %s18, 1
      %p41 = por %p39, %p40
      %p43 = scmp.ne.s32.totalorder %s26, %s42
      %p44 = scmp.eq.s32.totalorder %s18, 0
      %p45 = por %p43, %p44
      %s47 = sadd.s32 %s46, 1
      %p50 = scmp.eq.s32.totalorder %s12, 1
      %p51 = scmp.ne.s32.totalorder %s46, %s48
      %p52 = scmp.eq.s32.totalorder %s12, 0
      %p53 = por %p51, %p52
      %p54 = scmp.ne.s32.totalorder %s46, %s48
      %p55 = scmp.eq.s32.totalorder %s17, 1
      %p56 = por %p54, %p55
      %p57 = scmp.ne.s32.totalorder %s48, %s49
      %p58 = scmp.eq.s32.totalorder %s17, 0
      %p59 = por %p57, %p58
      %p60 = scmp.ne.s32.totalorder %s48, %s49
      %p61 = scmp.eq.s32.totalorder %s18, 1
      %p62 = por %p60, %p61
      %p64 = scmp.ne.s32.totalorder %s49, %s63
      %p65 = scmp.eq.s32.totalorder %s18, 0
      %p66 = por %p64, %p65
      %s68 = sadd.s32 %s67, 1
      %p71 = scmp.eq.s32.totalorder %s12, 1
      %p72 = scmp.ne.s32.totalorder %s67, %s69
      %p73 = scmp.eq.s32.totalorder %s12, 0
      %p74 = por %p72, %p73
      %p75 = scmp.ne.s32.totalorder %s67, %s69
      %p76 = scmp.eq.s32.totalorder %s17, 1
      %p77 = por %p75, %p76
      %p78 = scmp.ne.s32.totalorder %s69, %s70
      %p79 = scmp.eq.s32.totalorder %s17, 0
      %p80 = por %p78, %p79
      %p81 = scmp.ne.s32.totalorder %s69, %s70
      %p82 = scmp.eq.s32.totalorder %s18, 1
      %p83 = por %p81, %p82
      %p85 = scmp.ne.s32.totalorder %s70, %s84
      %p86 = scmp.eq.s32.totalorder %s18, 0
      %p87 = por %p85, %p86
      %s88 = ssub.s32 %s12, %s19
      %p89 = scmp.eq.s32.totalorder %s88, 0
      %s91 = sadd.s32 %s90, 1
      %s92 = scalar_select %p89, %s90, %s91
      %p95 = pneg %p89
      %p96 = scmp.eq.s32.totalorder %s12, 1
      %p97 = por %p95, %p96
      %p98 = scmp.ne.s32.totalorder %s90, %s93
      %p99 = scmp.eq.s32.totalorder %s12, 0
      %p100 = por %p98, %p99
      %p101 = scmp.ne.s32.totalorder %s90, %s93
      %p102 = scmp.eq.s32.totalorder %s17, 1
      %p103 = por %p101, %p102
      %p104 = scmp.ne.s32.totalorder %s93, %s94
      %p105 = scmp.eq.s32.totalorder %s17, 0
      %p106 = por %p104, %p105
      %p107 = scmp.ne.s32.totalorder %s93, %s94
      %p108 = scmp.eq.s32.totalorder %s18, 1
      %p109 = por %p107, %p108
      %p111 = scmp.ne.s32.totalorder %s94, %s110
      %p112 = scmp.eq.s32.totalorder %s18, 0
      %p113 = por %p111, %p112
      %p114 = scmp.le.s32.totalorder 1, %s12
      %p115 = scmp.lt.s32.totalorder %s12, 3
      %p116 = pnand %p114, %p115
      %p117 = pneg %p116
      // Predicated region
      $region9: #{tpu_custom_call.1} parent=5 // pred_check
        _
      $region10: #{tpu_custom_call.1} parent=5 // pred_check_branch
        %119 = sbr.rel (%p116) target = $region12
      $region11: #{tpu_custom_call.1} parent=5 // pred_region
        %s120 = ssub.s32 %s12, 1
        // Predicated region
        $region13: #{tpu_custom_call.1} parent=11 // pred_check
          %p121 = pneg %p59
        $region14: #{tpu_custom_call.1} parent=11 // pred_check_branch
          %123 = sbr.rel (%p121) target = $region16
        $region15: #{tpu_custom_call.1} parent=11 // pred_region
          _
        $region16: #{tpu_custom_call.1} parent=11 // pred_fallthru
          _
        // Predicated region
        $region17: #{tpu_custom_call.1} parent=11 // pred_check
          %p124 = pneg %p80
        $region18: #{tpu_custom_call.1} parent=11 // pred_check_branch
          %126 = sbr.rel (%p124) target = $region20
        $region19: #{tpu_custom_call.1} parent=11 // pred_region
          _
        $region20: #{tpu_custom_call.1} parent=11 // pred_fallthru
          _
      $region12: #{tpu_custom_call.1} parent=5 // pred_fallthru
        _
      %p127 = scmp.lt.s32.totalorder %s12, 2
      // Predicated region
      $region21: #{tpu_custom_call.1} parent=5 // pred_check
        %p128 = pneg %p127
      $region22: #{tpu_custom_call.1} parent=5 // pred_check_branch
        %130 = sbr.rel (%p128) target = $region24
      $region23: #{tpu_custom_call.1} parent=5 // pred_region
        // Predicated region
        $region25: #{tpu_custom_call.1} parent=23 // pred_check
          %p131 = pneg %p32
        $region26: #{tpu_custom_call.1} parent=23 // pred_check_branch
          %133 = sbr.rel (%p131) target = $region28
        $region27: #{tpu_custom_call.1} parent=23 // pred_region
          %s134 = smul.u32 50, %s12
          %p135 = scmp.lt.s32.totalorder %s134, 99
          %s136 = scalar_select %p135, %s134, 99
          %s137 = smul.addr %s136, 8
          %s138 = scalar_lea.vmem %s0, %s137
          %s139 = smul.u32 50, %s12
        $region28: #{tpu_custom_call.1} parent=23 // pred_fallthru
          _
      $region24: #{tpu_custom_call.1} parent=5 // pred_fallthru
        _
      %p140 = scmp.le.s32.totalorder 1, %s12
      %p141 = scmp.lt.s32.totalorder %s12, 3
      %p142 = pnand %p140, %p141
      %p143 = pneg %p142
      // Predicated region
      $region29: #{tpu_custom_call.1} parent=5 // pred_check
        _
      $region30: #{tpu_custom_call.1} parent=5 // pred_check_branch
        %145 = sbr.rel (%p142) target = $region32
      $region31: #{tpu_custom_call.1} parent=5 // pred_region
        %s146 = ssub.s32 %s12, 1
        %s147 = smul.u32 50, %s17
        %p148 = scmp.lt.s32.totalorder %s147, 99
        %s149 = scalar_select %p148, %s147, 99
        %s150 = smul.addr %s149, 8
        %s151 = scalar_lea.vmem %s0, %s150
        %p152 = pneg %p38
        %p153 = pneg %p35
        %p154 = pneg %p59
        %p155 = pneg %p56
        %p156 = pneg %p80
        %p157 = pneg %p77
        %p158 = pneg %p106
        %p159 = pneg %p103
        %s160 = sand.u32 %s93, 1
        %s161 = scalar_lea.sflag [#allocation3], %s160
        %s162 = sand.u32 %s93, 1
        %s163 = smul.addr %s162, 2
        %s164 = scalar_lea.vmem [#allocation2], %s163
        %s165 = smul.u32 50, %s17
        %p166 = scmp.lt.s32.totalorder %s165, 99
        %s167 = scalar_select %p166, %s165, 99
        %s168 = smul.addr %s167, 8
        %s169 = scalar_lea.vmem %s0, %s168
        %s170 = smul.u32 50, %s17
        %v171 = vld [vmem:[%s169] sm:$0xff]
        %v172 = vld [vmem:[%s169 + $0x8] sm:$0xff]
        %v173 = vld [vmem:[%s169 + $0x10] sm:$0xff]
        %v174 = vld [vmem:[%s169 + $0x18] sm:$0xff]
        %v175 = vld [vmem:[%s169 + $0x20] sm:$0xff]
        %v176 = vld [vmem:[%s169 + $0x28] sm:$0xff]
        %v177 = vld [vmem:[%s169 + $0x30] sm:$0xff]
        %v178 = vld [vmem:[%s169 + $0x38] sm:$0xff]
        %v179 = vld [vmem:[%s169 + $0x40] sm:$0xff]
        %v180 = vld [vmem:[%s169 + $0x48] sm:$0xff]
        %v181 = vld [vmem:[%s169 + $0x50] sm:$0xff]
        %v182 = vld [vmem:[%s169 + $0x58] sm:$0xff]
        %v183 = vld [vmem:[%s169 + $0x60] sm:$0xff]
        %v184 = vld [vmem:[%s169 + $0x68] sm:$0xff]
        %v185 = vld [vmem:[%s169 + $0x70] sm:$0xff]
        %v186 = vld [vmem:[%s169 + $0x78] sm:$0xff]
        %v187 = vld [vmem:[%s169 + $0x80] sm:$0xff]
        %v188 = vld [vmem:[%s169 + $0x88] sm:$0xff]
        %v189 = vld [vmem:[%s169 + $0x90] sm:$0xff]
        %v190 = vld [vmem:[%s169 + $0x98] sm:$0xff]
        %v191 = vld [vmem:[%s169 + $0xa0] sm:$0xff]
        %v192 = vld [vmem:[%s169 + $0xa8] sm:$0xff]
        %v193 = vld [vmem:[%s169 + $0xb0] sm:$0xff]
        %v194 = vld [vmem:[%s169 + $0xb8] sm:$0xff]
        %v195 = vld [vmem:[%s169 + $0xc0] sm:$0xff]
        %v196 = vld [vmem:[%s169 + $0xc8] sm:$0xff]
        %v197 = vld [vmem:[%s169 + $0xd0] sm:$0xff]
        %v198 = vld [vmem:[%s169 + $0xd8] sm:$0xff]
        %v199 = vld [vmem:[%s169 + $0xe0] sm:$0xff]
        %v200 = vld [vmem:[%s169 + $0xe8] sm:$0xff]
        %v201 = vld [vmem:[%s169 + $0xf0] sm:$0xff]
        %v202 = vld [vmem:[%s169 + $0xf8] sm:$0xff]
        %v203 = vld [vmem:[%s169 + $0x100] sm:$0xff]
        %v204 = vld [vmem:[%s169 + $0x108] sm:$0xff]
        %v205 = vld [vmem:[%s169 + $0x110] sm:$0xff]
        %v206 = vld [vmem:[%s169 + $0x118] sm:$0xff]
        %v207 = vld [vmem:[%s169 + $0x120] sm:$0xff]
        %v208 = vld [vmem:[%s169 + $0x128] sm:$0xff]
        %v209 = vld [vmem:[%s169 + $0x130] sm:$0xff]
        %v210 = vld [vmem:[%s169 + $0x138] sm:$0xff]
        %v211 = vld [vmem:[%s169 + $0x140] sm:$0xff]
        %v212 = vld [vmem:[%s169 + $0x148] sm:$0xff]
        %v213 = vld [vmem:[%s169 + $0x150] sm:$0xff]
        %v214 = vld [vmem:[%s169 + $0x158] sm:$0xff]
        %v215 = vld [vmem:[%s169 + $0x160] sm:$0xff]
        %v216 = vld [vmem:[%s169 + $0x168] sm:$0xff]
        %v217 = vld [vmem:[%s169 + $0x170] sm:$0xff]
        %v218 = vld [vmem:[%s169 + $0x178] sm:$0xff]
        %v219 = vld [vmem:[%s169 + $0x180] sm:$0xff]
        %v220 = vld [vmem:[%s169 + $0x188] sm:$0xff]
        %v221 = vld [vmem:[%s1] sm:$0xff]
        %v222 = vld [vmem:[%s1 + $0x8] sm:$0xff]
        %v223 = vld [vmem:[%s1 + $0x10] sm:$0xff]
        %v224 = vld [vmem:[%s1 + $0x18] sm:$0xff]
        %v225 = vld [vmem:[%s1 + $0x20] sm:$0xff]
        %v226 = vld [vmem:[%s1 + $0x28] sm:$0xff]
        %v227 = vld [vmem:[%s1 + $0x30] sm:$0xff]
        %v228 = vld [vmem:[%s1 + $0x38] sm:$0xff]
        %v229 = vld [vmem:[%s1 + $0x40] sm:$0xff]
        %v230 = vld [vmem:[%s1 + $0x48] sm:$0xff]
        %v231 = vld [vmem:[%s1 + $0x50] sm:$0xff]
        %v232 = vld [vmem:[%s1 + $0x58] sm:$0xff]
        %v233 = vld [vmem:[%s1 + $0x60] sm:$0xf]
        %v234 = vld [vmem:[%s2] sm:$0x1]
        %v236 = vlaneseq
        %v237 = vshrl.u32 %v236, 7
        %v238 = vsub.s32 0, %v237
        %v239 = vrot.slane %v234, %v238
        %vm241 = vcmask 818176
        %v243 = vsel %vm241, %v171, 0
        %v246 = vsel %vm241, %v172, 0
        %v249 = vsel %vm241, %v173, 0
        %v252 = vsel %vm241, %v174, 0
        %v255 = vsel %vm241, %v175, 0
        %v258 = vsel %vm241, %v176, 0
        %v261 = vsel %vm241, %v177, 0
        %v264 = vsel %vm241, %v178, 0
        %v267 = vsel %vm241, %v179, 0
        %v270 = vsel %vm241, %v180, 0
        %v273 = vsel %vm241, %v181, 0
        %v276 = vsel %vm241, %v182, 0
        %v279 = vsel %vm241, %v183, 0
        %v282 = vsel %vm241, %v184, 0
        %v285 = vsel %vm241, %v185, 0
        %v288 = vsel %vm241, %v186, 0
        %v291 = vsel %vm241, %v187, 0
        %v294 = vsel %vm241, %v188, 0
        %v297 = vsel %vm241, %v189, 0
        %v300 = vsel %vm241, %v190, 0
        %v303 = vsel %vm241, %v191, 0
        %v306 = vsel %vm241, %v192, 0
        %v309 = vsel %vm241, %v193, 0
        %v312 = vsel %vm241, %v194, 0
        %v315 = vsel %vm241, %v195, 0
        %v318 = vsel %vm241, %v196, 0
        %v321 = vsel %vm241, %v197, 0
        %v324 = vsel %vm241, %v198, 0
        %v327 = vsel %vm241, %v199, 0
        %v330 = vsel %vm241, %v200, 0
        %v333 = vsel %vm241, %v201, 0
        %v336 = vsel %vm241, %v202, 0
        %v339 = vsel %vm241, %v203, 0
        %v342 = vsel %vm241, %v204, 0
        %v345 = vsel %vm241, %v205, 0
        %v348 = vsel %vm241, %v206, 0
        %v351 = vsel %vm241, %v207, 0
        %v354 = vsel %vm241, %v208, 0
        %v357 = vsel %vm241, %v209, 0
        %v360 = vsel %vm241, %v210, 0
        %v363 = vsel %vm241, %v211, 0
        %v366 = vsel %vm241, %v212, 0
        %v369 = vsel %vm241, %v213, 0
        %v372 = vsel %vm241, %v214, 0
        %v375 = vsel %vm241, %v215, 0
        %v378 = vsel %vm241, %v216, 0
        %v381 = vsel %vm241, %v217, 0
        %v384 = vsel %vm241, %v218, 0
        %v387 = vsel %vm241, %v219, 0
        %v390 = vsel %vm241, %v220, 0
        %vm392 = vcmask 1043456
        %v394 = vsel %vm392, %v233, 0
        %396 = vmatprep.subr.mxu0 0.0
        %397 = vmatpush1.msra.mxu0 0.0
        %398 = vmatprep.subr.mxu0 0.0
        %399 = vmatpush1.msra.mxu0 0.0
        %400 = vmatprep.subr.mxu0 0.0
        %401 = vmatpush1.msra.mxu0 0.0
        %402 = vmatprep.subr.mxu0 0.0
        %403 = vmatpush1.msra.mxu0 %v394
        %404 = vmatprep.subr.mxu0 0.0
        %405 = vmatpush1.msra.mxu0 %v232
        %406 = vmatprep.subr.mxu0 0.0
        %407 = vmatpush1.msra.mxu0 %v231
        %408 = vmatprep.subr.mxu0 0.0
        %409 = vmatpush1.msra.mxu0 %v230
        %410 = vmatprep.subr.mxu0 0.0
        %411 = vmatpush1.msra.mxu0 %v229
        %412 = vmatprep.subr.mxu0 0.0
        %413 = vmatpush1.msra.mxu0 %v228
        %414 = vmatprep.subr.mxu0 0.0
        %415 = vmatpush1.msra.mxu0 %v227
        %416 = vmatprep.subr.mxu0 0.0
        %417 = vmatpush1.msra.mxu0 %v226
        %418 = vmatprep.subr.mxu0 0.0
        %419 = vmatpush1.msra.mxu0 %v225
        %420 = vmatprep.subr.mxu0 0.0
        %421 = vmatpush1.msra.mxu0 %v224
        %422 = vmatprep.subr.mxu0 0.0
        %423 = vmatpush1.msra.mxu0 %v223
        %424 = vmatprep.subr.mxu0 0.0
        %425 = vmatpush1.msra.mxu0 %v222
        %426 = vmatprep.subr.mxu0 0.0
        %427 = vmatpush1.msra.mxu0 %v221
        %428 = vmatprep.subr.mxu0 0.0
        %429 = vmatpush2.msra.mxu0 0.0
        %430 = vmatprep.subr.mxu0 0.0
        %431 = vmatpush2.msra.mxu0 0.0
        %432 = vmatprep.subr.mxu0 0.0
        %433 = vmatpush2.msra.mxu0 0.0
        %434 = vmatprep.subr.mxu0 0.0
        %435 = vmatpush2.msra.mxu0 0.0
        %436 = vmatprep.subr.mxu0 0.0
        %437 = vmatpush2.msra.mxu0 0.0
        %438 = vmatprep.subr.mxu0 0.0
        %439 = vmatpush2.msra.mxu0 0.0
        %440 = vmatprep.subr.mxu0 0.0
        %441 = vmatpush2.msra.mxu0 0.0
        %442 = vmatprep.subr.mxu0 0.0
        %443 = vmatpush2.msra.mxu0 0.0
        %444 = vmatprep.subr.mxu0 0.0
        %445 = vmatpush2.msra.mxu0 0.0
        %446 = vmatprep.subr.mxu0 0.0
        %447 = vmatpush2.msra.mxu0 0.0
        %448 = vmatprep.subr.mxu0 0.0
        %449 = vmatpush2.msra.mxu0 0.0
        %450 = vmatprep.subr.mxu0 0.0
        %451 = vmatpush2.msra.mxu0 0.0
        %452 = vmatprep.subr.mxu0 0.0
        %453 = vmatpush2.msra.mxu0 0.0
        %454 = vmatprep.subr.mxu0 0.0
        %455 = vmatpush2.msra.mxu0 0.0
        %456 = vmatprep.subr.mxu0 0.0
        %457 = vmatpush2.msra.mxu0 0.0
        %458 = vmatprep.subr.mxu0 0.0
        %459 = vmatpush2.msra.mxu0 0.0
        %460 = vmatprep.mubr.f32.mxu0 0.0
        %461 = vmatmul.mubr.f32.gmra.mxu0 %v243
        %v462 = vpop.f32.mrf.mxu0
        %v463 = vadd.f32 %v239, %v462
        %v464 = vpop.f32.mrf.mxu0
        %465 = vmatprep.mubr.f32.mxu0 0.0
        %466 = vmatmul.mubr.f32.gmra.mxu0 %v246
        %v467 = vpop.f32.mrf.mxu0
        %v468 = vadd.f32 %v239, %v467
        %v469 = vpop.f32.mrf.mxu0
        %470 = vmatprep.mubr.f32.mxu0 0.0
        %471 = vmatmul.mubr.f32.gmra.mxu0 %v249
        %v472 = vpop.f32.mrf.mxu0
        %v473 = vadd.f32 %v239, %v472
        %v474 = vpop.f32.mrf.mxu0
        %475 = vmatprep.mubr.f32.mxu0 0.0
        %476 = vmatmul.mubr.f32.gmra.mxu0 %v252
        %v477 = vpop.f32.mrf.mxu0
        %v478 = vadd.f32 %v239, %v477
        %v479 = vpop.f32.mrf.mxu0
        %480 = vmatprep.mubr.f32.mxu0 0.0
        %481 = vmatmul.mubr.f32.gmra.mxu0 %v255
        %v482 = vpop.f32.mrf.mxu0
        %v483 = vadd.f32 %v239, %v482
        %v484 = vpop.f32.mrf.mxu0
        %485 = vmatprep.mubr.f32.mxu0 0.0
        %486 = vmatmul.mubr.f32.gmra.mxu0 %v258
        %v487 = vpop.f32.mrf.mxu0
        %v488 = vadd.f32 %v239, %v487
        %v489 = vpop.f32.mrf.mxu0
        %490 = vmatprep.mubr.f32.mxu0 0.0
        %491 = vmatmul.mubr.f32.gmra.mxu0 %v261
        %v492 = vpop.f32.mrf.mxu0
        %v493 = vadd.f32 %v239, %v492
        %v494 = vpop.f32.mrf.mxu0
        %495 = vmatprep.mubr.f32.mxu0 0.0
        %496 = vmatmul.mubr.f32.gmra.mxu0 %v264
        %v497 = vpop.f32.mrf.mxu0
        %v498 = vadd.f32 %v239, %v497
        %v499 = vpop.f32.mrf.mxu0
        %500 = vmatprep.mubr.f32.mxu0 0.0
        %501 = vmatmul.mubr.f32.gmra.mxu0 %v267
        %v502 = vpop.f32.mrf.mxu0
        %v503 = vadd.f32 %v239, %v502
        %v504 = vpop.f32.mrf.mxu0
        %505 = vmatprep.mubr.f32.mxu0 0.0
        %506 = vmatmul.mubr.f32.gmra.mxu0 %v270
        %v507 = vpop.f32.mrf.mxu0
        %v508 = vadd.f32 %v239, %v507
        %v509 = vpop.f32.mrf.mxu0
        %510 = vmatprep.mubr.f32.mxu0 0.0
        %511 = vmatmul.mubr.f32.gmra.mxu0 %v273
        %v512 = vpop.f32.mrf.mxu0
        %v513 = vadd.f32 %v239, %v512
        %v514 = vpop.f32.mrf.mxu0
        %515 = vmatprep.mubr.f32.mxu0 0.0
        %516 = vmatmul.mubr.f32.gmra.mxu0 %v276
        %v517 = vpop.f32.mrf.mxu0
        %v518 = vadd.f32 %v239, %v517
        %v519 = vpop.f32.mrf.mxu0
        %520 = vmatprep.mubr.f32.mxu0 0.0
        %521 = vmatmul.mubr.f32.gmra.mxu0 %v279
        %v522 = vpop.f32.mrf.mxu0
        %v523 = vadd.f32 %v239, %v522
        %v524 = vpop.f32.mrf.mxu0
        %525 = vmatprep.mubr.f32.mxu0 0.0
        %526 = vmatmul.mubr.f32.gmra.mxu0 %v282
        %v527 = vpop.f32.mrf.mxu0
        %v528 = vadd.f32 %v239, %v527
        %v529 = vpop.f32.mrf.mxu0
        %530 = vmatprep.mubr.f32.mxu0 0.0
        %531 = vmatmul.mubr.f32.gmra.mxu0 %v285
        %v532 = vpop.f32.mrf.mxu0
        %v533 = vadd.f32 %v239, %v532
        %v534 = vpop.f32.mrf.mxu0
        %535 = vmatprep.mubr.f32.mxu0 0.0
        %536 = vmatmul.mubr.f32.gmra.mxu0 %v288
        %v537 = vpop.f32.mrf.mxu0
        %v538 = vadd.f32 %v239, %v537
        %v539 = vpop.f32.mrf.mxu0
        %540 = vmatprep.mubr.f32.mxu0 0.0
        %541 = vmatmul.mubr.f32.gmra.mxu0 %v291
        %v542 = vpop.f32.mrf.mxu0
        %v543 = vadd.f32 %v239, %v542
        %v544 = vpop.f32.mrf.mxu0
        %545 = vmatprep.mubr.f32.mxu0 0.0
        %546 = vmatmul.mubr.f32.gmra.mxu0 %v294
        %v547 = vpop.f32.mrf.mxu0
        %v548 = vadd.f32 %v239, %v547
        %v549 = vpop.f32.mrf.mxu0
        %550 = vmatprep.mubr.f32.mxu0 0.0
        %551 = vmatmul.mubr.f32.gmra.mxu0 %v297
        %v552 = vpop.f32.mrf.mxu0
        %v553 = vadd.f32 %v239, %v552
        %v554 = vpop.f32.mrf.mxu0
        %555 = vmatprep.mubr.f32.mxu0 0.0
        %556 = vmatmul.mubr.f32.gmra.mxu0 %v300
        %v557 = vpop.f32.mrf.mxu0
        %v558 = vadd.f32 %v239, %v557
        %v559 = vpop.f32.mrf.mxu0
        %560 = vmatprep.mubr.f32.mxu0 0.0
        %561 = vmatmul.mubr.f32.gmra.mxu0 %v303
        %v562 = vpop.f32.mrf.mxu0
        %v563 = vadd.f32 %v239, %v562
        %v564 = vpop.f32.mrf.mxu0
        %565 = vmatprep.mubr.f32.mxu0 0.0
        %566 = vmatmul.mubr.f32.gmra.mxu0 %v306
        %v567 = vpop.f32.mrf.mxu0
        %v568 = vadd.f32 %v239, %v567
        %v569 = vpop.f32.mrf.mxu0
        %570 = vmatprep.mubr.f32.mxu0 0.0
        %571 = vmatmul.mubr.f32.gmra.mxu0 %v309
        %v572 = vpop.f32.mrf.mxu0
        %v573 = vadd.f32 %v239, %v572
        %v574 = vpop.f32.mrf.mxu0
        %575 = vmatprep.mubr.f32.mxu0 0.0
        %576 = vmatmul.mubr.f32.gmra.mxu0 %v312
        %v577 = vpop.f32.mrf.mxu0
        %v578 = vadd.f32 %v239, %v577
        %v579 = vpop.f32.mrf.mxu0
        %580 = vmatprep.mubr.f32.mxu0 0.0
        %581 = vmatmul.mubr.f32.gmra.mxu0 %v315
        %v582 = vpop.f32.mrf.mxu0
        %v583 = vadd.f32 %v239, %v582
        %v584 = vpop.f32.mrf.mxu0
        %585 = vmatprep.mubr.f32.mxu0 0.0
        %586 = vmatmul.mubr.f32.gmra.mxu0 %v318
        %v587 = vpop.f32.mrf.mxu0
        %v588 = vadd.f32 %v239, %v587
        %v589 = vpop.f32.mrf.mxu0
        %590 = vmatprep.mubr.f32.mxu0 0.0
        %591 = vmatmul.mubr.f32.gmra.mxu0 %v321
        %v592 = vpop.f32.mrf.mxu0
        %v593 = vadd.f32 %v239, %v592
        %v594 = vpop.f32.mrf.mxu0
        %595 = vmatprep.mubr.f32.mxu0 0.0
        %596 = vmatmul.mubr.f32.gmra.mxu0 %v324
        %v597 = vpop.f32.mrf.mxu0
        %v598 = vadd.f32 %v239, %v597
        %v599 = vpop.f32.mrf.mxu0
        %600 = vmatprep.mubr.f32.mxu0 0.0
        %601 = vmatmul.mubr.f32.gmra.mxu0 %v327
        %v602 = vpop.f32.mrf.mxu0
        %v603 = vadd.f32 %v239, %v602
        %v604 = vpop.f32.mrf.mxu0
        %605 = vmatprep.mubr.f32.mxu0 0.0
        %606 = vmatmul.mubr.f32.gmra.mxu0 %v330
        %v607 = vpop.f32.mrf.mxu0
        %v608 = vadd.f32 %v239, %v607
        %v609 = vpop.f32.mrf.mxu0
        %610 = vmatprep.mubr.f32.mxu0 0.0
        %611 = vmatmul.mubr.f32.gmra.mxu0 %v333
        %v612 = vpop.f32.mrf.mxu0
        %v613 = vadd.f32 %v239, %v612
        %v614 = vpop.f32.mrf.mxu0
        %615 = vmatprep.mubr.f32.mxu0 0.0
        %616 = vmatmul.mubr.f32.gmra.mxu0 %v336
        %v617 = vpop.f32.mrf.mxu0
        %v618 = vadd.f32 %v239, %v617
        %v619 = vpop.f32.mrf.mxu0
        %620 = vmatprep.mubr.f32.mxu0 0.0
        %621 = vmatmul.mubr.f32.gmra.mxu0 %v339
        %v622 = vpop.f32.mrf.mxu0
        %v623 = vadd.f32 %v239, %v622
        %v624 = vpop.f32.mrf.mxu0
        %625 = vmatprep.mubr.f32.mxu0 0.0
        %626 = vmatmul.mubr.f32.gmra.mxu0 %v342
        %v627 = vpop.f32.mrf.mxu0
        %v628 = vadd.f32 %v239, %v627
        %v629 = vpop.f32.mrf.mxu0
        %630 = vmatprep.mubr.f32.mxu0 0.0
        %631 = vmatmul.mubr.f32.gmra.mxu0 %v345
        %v632 = vpop.f32.mrf.mxu0
        %v633 = vadd.f32 %v239, %v632
        %v634 = vpop.f32.mrf.mxu0
        %635 = vmatprep.mubr.f32.mxu0 0.0
        %636 = vmatmul.mubr.f32.gmra.mxu0 %v348
        %v637 = vpop.f32.mrf.mxu0
        %v638 = vadd.f32 %v239, %v637
        %v639 = vpop.f32.mrf.mxu0
        %640 = vmatprep.mubr.f32.mxu0 0.0
        %641 = vmatmul.mubr.f32.gmra.mxu0 %v351
        %v642 = vpop.f32.mrf.mxu0
        %v643 = vadd.f32 %v239, %v642
        %v644 = vpop.f32.mrf.mxu0
        %645 = vmatprep.mubr.f32.mxu0 0.0
        %646 = vmatmul.mubr.f32.gmra.mxu0 %v354
        %v647 = vpop.f32.mrf.mxu0
        %v648 = vadd.f32 %v239, %v647
        %v649 = vpop.f32.mrf.mxu0
        %650 = vmatprep.mubr.f32.mxu0 0.0
        %651 = vmatmul.mubr.f32.gmra.mxu0 %v357
        %v652 = vpop.f32.mrf.mxu0
        %v653 = vadd.f32 %v239, %v652
        %v654 = vpop.f32.mrf.mxu0
        %655 = vmatprep.mubr.f32.mxu0 0.0
        %656 = vmatmul.mubr.f32.gmra.mxu0 %v360
        %v657 = vpop.f32.mrf.mxu0
        %v658 = vadd.f32 %v239, %v657
        %v659 = vpop.f32.mrf.mxu0
        %660 = vmatprep.mubr.f32.mxu0 0.0
        %661 = vmatmul.mubr.f32.gmra.mxu0 %v363
        %v662 = vpop.f32.mrf.mxu0
        %v663 = vadd.f32 %v239, %v662
        %v664 = vpop.f32.mrf.mxu0
        %665 = vmatprep.mubr.f32.mxu0 0.0
        %666 = vmatmul.mubr.f32.gmra.mxu0 %v366
        %v667 = vpop.f32.mrf.mxu0
        %v668 = vadd.f32 %v239, %v667
        %v669 = vpop.f32.mrf.mxu0
        %670 = vmatprep.mubr.f32.mxu0 0.0
        %671 = vmatmul.mubr.f32.gmra.mxu0 %v369
        %v672 = vpop.f32.mrf.mxu0
        %v673 = vadd.f32 %v239, %v672
        %v674 = vpop.f32.mrf.mxu0
        %675 = vmatprep.mubr.f32.mxu0 0.0
        %676 = vmatmul.mubr.f32.gmra.mxu0 %v372
        %v677 = vpop.f32.mrf.mxu0
        %v678 = vadd.f32 %v239, %v677
        %v679 = vpop.f32.mrf.mxu0
        %680 = vmatprep.mubr.f32.mxu0 0.0
        %681 = vmatmul.mubr.f32.gmra.mxu0 %v375
        %v682 = vpop.f32.mrf.mxu0
        %v683 = vadd.f32 %v239, %v682
        %v684 = vpop.f32.mrf.mxu0
        %685 = vmatprep.mubr.f32.mxu0 0.0
        %686 = vmatmul.mubr.f32.gmra.mxu0 %v378
        %v687 = vpop.f32.mrf.mxu0
        %v688 = vadd.f32 %v239, %v687
        %v689 = vpop.f32.mrf.mxu0
        %690 = vmatprep.mubr.f32.mxu0 0.0
        %691 = vmatmul.mubr.f32.gmra.mxu0 %v381
        %v692 = vpop.f32.mrf.mxu0
        %v693 = vadd.f32 %v239, %v692
        %v694 = vpop.f32.mrf.mxu0
        %695 = vmatprep.mubr.f32.mxu0 0.0
        %696 = vmatmul.mubr.f32.gmra.mxu0 %v384
        %v697 = vpop.f32.mrf.mxu0
        %v698 = vadd.f32 %v239, %v697
        %v699 = vpop.f32.mrf.mxu0
        %700 = vmatprep.mubr.f32.mxu0 0.0
        %701 = vmatmul.mubr.f32.gmra.mxu0 %v387
        %v702 = vpop.f32.mrf.mxu0
        %v703 = vadd.f32 %v239, %v702
        %v704 = vpop.f32.mrf.mxu0
        %705 = vmatprep.mubr.f32.mxu0 0.0
        %706 = vmatmul.mubr.f32.gmra.mxu0 %v390
        %v707 = vpop.f32.mrf.mxu0
        %v708 = vadd.f32 %v239, %v707
        %v709 = vpop.f32.mrf.mxu0
        %710 = vdwg.mxu0
        %v711 = vadd.f32 %v463, %v468
        %v712 = vadd.f32 %v711, %v473
        %v713 = vadd.f32 %v712, %v478
        %v714 = vadd.f32 %v713, %v483
        %v715 = vadd.f32 %v714, %v488
        %v716 = vadd.f32 %v715, %v493
        %v717 = vadd.f32 %v716, %v498
        %v718 = vadd.f32 %v717, %v503
        %v719 = vadd.f32 %v718, %v508
        %v720 = vadd.f32 %v719, %v513
        %v721 = vadd.f32 %v720, %v518
        %v722 = vadd.f32 %v721, %v523
        %v723 = vadd.f32 %v722, %v528
        %v724 = vadd.f32 %v723, %v533
        %v725 = vadd.f32 %v724, %v538
        %v726 = vadd.f32 %v725, %v543
        %v727 = vadd.f32 %v726, %v548
        %v728 = vadd.f32 %v727, %v553
        %v729 = vadd.f32 %v728, %v558
        %v730 = vadd.f32 %v729, %v563
        %v731 = vadd.f32 %v730, %v568
        %v732 = vadd.f32 %v731, %v573
        %v733 = vadd.f32 %v732, %v578
        %v734 = vadd.f32 %v733, %v583
        %v735 = vadd.f32 %v734, %v588
        %v736 = vadd.f32 %v735, %v593
        %v737 = vadd.f32 %v736, %v598
        %v738 = vadd.f32 %v737, %v603
        %v739 = vadd.f32 %v738, %v608
        %v740 = vadd.f32 %v739, %v613
        %v741 = vadd.f32 %v740, %v618
        %v742 = vadd.f32 %v741, %v623
        %v743 = vadd.f32 %v742, %v628
        %v744 = vadd.f32 %v743, %v633
        %v745 = vadd.f32 %v744, %v638
        %v746 = vadd.f32 %v745, %v643
        %v747 = vadd.f32 %v746, %v648
        %v748 = vadd.f32 %v747, %v653
        %v749 = vadd.f32 %v748, %v658
        %v750 = vadd.f32 %v749, %v663
        %v751 = vadd.f32 %v750, %v668
        %v752 = vadd.f32 %v751, %v673
        %v753 = vadd.f32 %v752, %v678
        %v754 = vadd.f32 %v753, %v683
        %v755 = vadd.f32 %v754, %v688
        %v756 = vadd.f32 %v755, %v693
        %v757 = vadd.f32 %v756, %v698
        %v758 = vadd.f32 %v757, %v703
        %v759 = vadd.f32 %v758, %v708
        %v760 = vrot.slane %v759, 4
        %v761 = vadd.f32 %v759, %v760
        %v762 = vrot.slane %v761, 2
        %v763 = vadd.f32 %v761, %v762
        %v764 = vrot.slane %v763, 1
        %v765 = vadd.f32 %v763, %v764
        %v766 = vmul.f32 %v463, %v463
        %v767 = vmul.f32 %v468, %v468
        %v768 = vmul.f32 %v473, %v473
        %v769 = vmul.f32 %v478, %v478
        %v770 = vmul.f32 %v483, %v483
        %v771 = vmul.f32 %v488, %v488
        %v772 = vmul.f32 %v493, %v493
        %v773 = vmul.f32 %v498, %v498
        %v774 = vmul.f32 %v503, %v503
        %v775 = vmul.f32 %v508, %v508
        %v776 = vmul.f32 %v513, %v513
        %v777 = vmul.f32 %v518, %v518
        %v778 = vmul.f32 %v523, %v523
        %v779 = vmul.f32 %v528, %v528
        %v780 = vmul.f32 %v533, %v533
        %v781 = vmul.f32 %v538, %v538
        %v782 = vmul.f32 %v543, %v543
        %v783 = vmul.f32 %v548, %v548
        %v784 = vmul.f32 %v553, %v553
        %v785 = vmul.f32 %v558, %v558
        %v786 = vmul.f32 %v563, %v563
        %v787 = vmul.f32 %v568, %v568
        %v788 = vmul.f32 %v573, %v573
        %v789 = vmul.f32 %v578, %v578
        %v790 = vmul.f32 %v583, %v583
        %v791 = vmul.f32 %v588, %v588
        %v792 = vmul.f32 %v593, %v593
        %v793 = vmul.f32 %v598, %v598
        %v794 = vmul.f32 %v603, %v603
        %v795 = vmul.f32 %v608, %v608
        %v796 = vmul.f32 %v613, %v613
        %v797 = vmul.f32 %v618, %v618
        %v798 = vmul.f32 %v623, %v623
        %v799 = vmul.f32 %v628, %v628
        %v800 = vmul.f32 %v633, %v633
        %v801 = vmul.f32 %v638, %v638
        %v802 = vmul.f32 %v643, %v643
        %v803 = vmul.f32 %v648, %v648
        %v804 = vmul.f32 %v653, %v653
        %v805 = vmul.f32 %v658, %v658
        %v806 = vmul.f32 %v663, %v663
        %v807 = vmul.f32 %v668, %v668
        %v808 = vmul.f32 %v673, %v673
        %v809 = vmul.f32 %v678, %v678
        %v810 = vmul.f32 %v683, %v683
        %v811 = vmul.f32 %v688, %v688
        %v812 = vmul.f32 %v693, %v693
        %v813 = vmul.f32 %v698, %v698
        %v814 = vmul.f32 %v703, %v703
        %v815 = vmul.f32 %v708, %v708
        %v816 = vadd.f32 %v766, %v767
        %v817 = vadd.f32 %v816, %v768
        %v818 = vadd.f32 %v817, %v769
        %v819 = vadd.f32 %v818, %v770
        %v820 = vadd.f32 %v819, %v771
        %v821 = vadd.f32 %v820, %v772
        %v822 = vadd.f32 %v821, %v773
        %v823 = vadd.f32 %v822, %v774
        %v824 = vadd.f32 %v823, %v775
        %v825 = vadd.f32 %v824, %v776
        %v826 = vadd.f32 %v825, %v777
        %v827 = vadd.f32 %v826, %v778
        %v828 = vadd.f32 %v827, %v779
        %v829 = vadd.f32 %v828, %v780
        %v830 = vadd.f32 %v829, %v781
        %v831 = vadd.f32 %v830, %v782
        %v832 = vadd.f32 %v831, %v783
        %v833 = vadd.f32 %v832, %v784
        %v834 = vadd.f32 %v833, %v785
        %v835 = vadd.f32 %v834, %v786
        %v836 = vadd.f32 %v835, %v787
        %v837 = vadd.f32 %v836, %v788
        %v838 = vadd.f32 %v837, %v789
        %v839 = vadd.f32 %v838, %v790
        %v840 = vadd.f32 %v839, %v791
        %v841 = vadd.f32 %v840, %v792
        %v842 = vadd.f32 %v841, %v793
        %v843 = vadd.f32 %v842, %v794
        %v844 = vadd.f32 %v843, %v795
        %v845 = vadd.f32 %v844, %v796
        %v846 = vadd.f32 %v845, %v797
        %v847 = vadd.f32 %v846, %v798
        %v848 = vadd.f32 %v847, %v799
        %v849 = vadd.f32 %v848, %v800
        %v850 = vadd.f32 %v849, %v801
        %v851 = vadd.f32 %v850, %v802
        %v852 = vadd.f32 %v851, %v803
        %v853 = vadd.f32 %v852, %v804
        %v854 = vadd.f32 %v853, %v805
        %v855 = vadd.f32 %v854, %v806
        %v856 = vadd.f32 %v855, %v807
        %v857 = vadd.f32 %v856, %v808
        %v858 = vadd.f32 %v857, %v809
        %v859 = vadd.f32 %v858, %v810
        %v860 = vadd.f32 %v859, %v811
        %v861 = vadd.f32 %v860, %v812
        %v862 = vadd.f32 %v861, %v813
        %v863 = vadd.f32 %v862, %v814
        %v864 = vadd.f32 %v863, %v815
        %v865 = vrot.slane %v864, 4
        %v866 = vadd.f32 %v864, %v865
        %v867 = vrot.slane %v866, 2
        %v868 = vadd.f32 %v866, %v867
        %v869 = vrot.slane %v868, 1
        %v870 = vadd.f32 %v868, %v869
        %vm871 = vcmask 1040384
        %v872 = vsel %vm871, %v765, %v870
        %873 = vst [vmem:[%s164] sm:$0x3] %v872
        %s874 = sand.u32 %s93, 1
        %s875 = scalar_lea.sflag [#allocation3], %s874
        %s876 = sand.u32 %s93, 1
        %s877 = smul.addr %s876, 2
        %s878 = scalar_lea.vmem [#allocation2], %s877
        // Predicated region
        $region33: #{tpu_custom_call.1} parent=31 // pred_check
          %p879 = pneg %p103
        $region34: #{tpu_custom_call.1} parent=31 // pred_check_branch
          %881 = sbr.rel (%p879) target = $region36
        $region35: #{tpu_custom_call.1} parent=31 // pred_region
          %s883 = ssub.s32 32, 32
          %884 = vsyncadd %s875, %s883
          %s885 = smul.addr %s17, 32
          %s886 = scalar_lea.hbm %s3, %s885
          %s888 = sshll.u32 %s878, 4
          %s889 = int_to_ptr.vmem [resolvable:$true] %s888
          %891 = dma.vmem_to_hbm [thread:$0]  %s889, 32, %s886, %s875
        $region36: #{tpu_custom_call.1} parent=31 // pred_fallthru
          _
      $region32: #{tpu_custom_call.1} parent=5 // pred_fallthru
        _
      %p892 = scmp.le.s32.totalorder 2, %s12
      // Predicated region
      $region37: #{tpu_custom_call.1} parent=5 // pred_check
        %p893 = pneg %p892
      $region38: #{tpu_custom_call.1} parent=5 // pred_check_branch
        %895 = sbr.rel (%p893) target = $region40
      $region39: #{tpu_custom_call.1} parent=5 // pred_region
        %s896 = ssub.s32 %s12, 2
        // Predicated region
        $region41: #{tpu_custom_call.1} parent=39 // pred_check
          %p897 = pneg %p109
        $region42: #{tpu_custom_call.1} parent=39 // pred_check_branch
          %899 = sbr.rel (%p897) target = $region44
        $region43: #{tpu_custom_call.1} parent=39 // pred_region
          %s900 = sand.u32 %s94, 1
          %s901 = scalar_lea.sflag [#allocation3], %s900
          %s902 = sand.u32 %s94, 1
          %s903 = smul.addr %s902, 2
          %s904 = scalar_lea.vmem [#allocation2], %s903
          %905 = dma.done %s901, 32
        $region44: #{tpu_custom_call.1} parent=39 // pred_fallthru
          _
      $region40: #{tpu_custom_call.1} parent=5 // pred_fallthru
        _
    $region6: #{tpu_custom_call.1} parent=1 // loop_footer
      %s16 = sadd.s32 1, %s12
    $region7: #{tpu_custom_call.1} parent=1 // loop_footer_branch
      %11 = sbr.rel target = $region3
    $region8: #{tpu_custom_call.1} parent=1 // loop_exit
      _
    %906 = vsyncpa [#allocation3], 1
    %s907 = scalar_lea.sflag [#allocation3], 1
    %908 = vsyncpa %s907, 1

</llo_original>
